<compile_context>
chip_gen: v5e
topology: v5e:2x2
jax: 0.10.0
libtpu: 0.0.40
codegen_flags: <defaults>
</compile_context>

<pallas_src>
import functools

import jax
import jax.numpy as jnp
from jax.experimental import pallas as pl
from jax.experimental.pallas import tpu as pltpu


def _decoder_kernel(x_ref, w_ref, b_ref, out_ref):
    # Single fused linear: [tm, L] @ [L, F] + [1, F], f32 accumulation on MXU.
    acc = jnp.dot(x_ref[...], w_ref[...], preferred_element_type=jnp.float32)
    out_ref[...] = (acc + b_ref[...]).astype(out_ref.dtype)


def _round_up(n, m):
    return ((n + m - 1) // m) * m


# Only force a 2-way split (for v7x dual TensorCores) above this batch size;
# below it the per-step overhead (~0.35 us) would dominate each half anyway.
_MIN_SPLIT_BATCH = 1024


def _choose_batch_tile(B, block_b, sublane):
    """Sublane-aligned batch tile; guarantees >=2 grid steps for large B."""
    block_b = _round_up(max(block_b, sublane), sublane)   # correctness: tm % sublane == 0
    tm = min(block_b, _round_up(B, sublane))
    if B >= _MIN_SPLIT_BATCH and pl.cdiv(B, tm) < 2:
        tm = _round_up(pl.cdiv(B, 2), sublane)
    return tm


def fuse_decoder_params(w1, b1, w2, b2, *, compute_dtype=None):
    """Collapse fc2(fc1(x)) = x @ (w1 @ w2) + (b1 @ w2 + b2).

    Call this ONCE at parameter-load time and reuse the result.
    w1: [L, H], b1: [H], w2: [H, F], b2: [F]  (already transposed vs PyTorch).
    Returns (w_f [L, F] in compute dtype, b_f [1, F] in f32).
    """
    w_f = jnp.dot(w1.astype(jnp.float32), w2.astype(jnp.float32))       # [L, F]
    b_f = jnp.dot(b1.astype(jnp.float32), w2.astype(jnp.float32)) \
        + b2.astype(jnp.float32)                                        # [F]
    if compute_dtype is not None:
        w_f = w_f.astype(compute_dtype)
    return w_f, b_f.reshape(1, -1)   # bias stays f32 for the VPU add


def vae_hand_decoder_fused(x, w_f, b_f, *, block_b=8192):
    """Forward pass with pre-fused params.  x: [B, L] -> [B, F] in x.dtype."""
    B, L = x.shape
    F = w_f.shape[1]
    out_dtype = x.dtype

    # Match x to the (possibly bf16) fused-weight dtype; f32 path is a no-op.
    x_c = x if x.dtype == w_f.dtype else x.astype(w_f.dtype)

    sublane = 16 if jnp.dtype(w_f.dtype).itemsize < 4 else 8
    tm = _choose_batch_tile(B, block_b, sublane)
    grid = (pl.cdiv(B, tm),)   # Pallas masks the boundary block; no jnp.pad of x.

    in_item = jnp.dtype(x_c.dtype).itemsize
    out_item = jnp.dtype(out_dtype).itemsize
    cost = pl.CostEstimate(
        flops=2 * B * L * F,
        transcendentals=0,
        bytes_accessed=(B * L * in_item          # x
                        + L * F * in_item        # fused W (fetched once)
                        + F * 4                  # fused bias (f32)
                        + B * F * out_item),     # output, written exactly once
    )

    return pl.pallas_call(
        _decoder_kernel,
        out_shape=jax.ShapeDtypeStruct((B, F), out_dtype),
        grid=grid,
        in_specs=[
            pl.BlockSpec((tm, L), lambda i: (i, 0)),   # x, tiled over batch
            pl.BlockSpec((L, F), lambda i: (0, 0)),    # fused W, VMEM-resident
            pl.BlockSpec((1, F), lambda i: (0, 0)),    # fused bias, VMEM-resident
        ],
        out_specs=pl.BlockSpec((tm, F), lambda i: (i, 0)),  # true 63-wide output
        compiler_params=pltpu.CompilerParams(
            dimension_semantics=("parallel",),
        ),
        cost_estimate=cost,
    )(x_c, w_f, b_f)


def vae_hand_decoder(x, w1, b1, w2, b2, *, block_b=8192, compute_dtype=None):
    """Convenience wrapper (fuses per call).  Prefer fuse_decoder_params once
    at load time + vae_hand_decoder_fused for the hot path."""
    w_f, b_f = fuse_decoder_params(w1, b1, w2, b2, compute_dtype=compute_dtype)
    return vae_hand_decoder_fused(x, w_f, b_f, block_b=block_b)


def init_params(key, num_joints=21, latent_premap_dims=40, latent_dims=23,
                dtype=jnp.float32):
    """Deterministic synthetic params matching nn.Linear shapes.
    PyTorch stores weight as (out, in); we return the transposed (in, out)."""
    k1, k2, k3, k4 = jax.random.split(key, 4)
    w1 = jax.random.normal(k1, (latent_dims, latent_premap_dims), dtype) * 0.1
    b1 = jax.random.normal(k2, (latent_premap_dims,), dtype) * 0.1
    w2 = jax.random.normal(k3, (latent_premap_dims, num_joints * 3), dtype) * 0.1
    b2 = jax.random.normal(k4, (num_joints * 3,), dtype) * 0.1
    return w1, b1, w2, b2


if __name__ == "__main__":
    key = jax.random.PRNGKey(0)
    kx, kp = jax.random.split(key)

    num_joints = 21
    latent_premap_dims = 40
    latent_dims = 23
    batch = 8

    x = jax.random.normal(kx, (batch, latent_dims), jnp.float32)
    w1, b1, w2, b2 = init_params(kp, num_joints, latent_premap_dims, latent_dims)

    # Fuse the two linears once at "load time"; the per-call path sees only
    # the single fused weight/bias.
    w_f, b_f = fuse_decoder_params(w1, b1, w2, b2)

    decoder = jax.jit(functools.partial(vae_hand_decoder_fused, block_b=8192))
    out = jax.block_until_ready(decoder(x, w_f, b_f))

    # Reference in plain JAX (unfused two-matmul form) to check semantics.
    ref = (x @ w1 + b1) @ w2 + b2
    assert out.shape == (batch, num_joints * 3), out.shape
    assert jnp.allclose(out, ref, atol=1e-5, rtol=1e-5), "mismatch vs reference"

    print("KERNEL_OK")
</pallas_src>

<mosaic_0001>
module attributes {stable_mosaic.version = 11 : i64} {
  func.func @_decoder_kernel(%arg0: i32, %arg1: memref<8x23xf32, #tpu.memory_space<vmem>>, %arg2: memref<23x63xf32, #tpu.memory_space<vmem>>, %arg3: memref<1x63xf32, #tpu.memory_space<vmem>>, %arg4: memref<8x63xf32, #tpu.memory_space<vmem>>) attributes {dimension_semantics = [#tpu.dimension_semantics<parallel>], iteration_bounds = array<i64: 1>, scalar_prefetch = 0 : i64, scratch_operands = 0 : i64, tpu.core_type = #tpu.core_type<tc>, window_params = [{transform_indices = @transform_0, window_bounds = array<i64: 8, 23>}, {pipeline_mode = #tpu.pipeline_mode<synchronous>, transform_indices = @transform_1, window_bounds = array<i64: 23, 63>}, {pipeline_mode = #tpu.pipeline_mode<synchronous>, transform_indices = @transform_2, window_bounds = array<i64: 1, 63>}, {transform_indices = @transform_3, window_bounds = array<i64: 8, 63>}]} {
    %c0 = arith.constant 0 : index
    %c0_0 = arith.constant 0 : index
    %0 = vector.load %arg1[%c0, %c0_0] : memref<8x23xf32, #tpu.memory_space<vmem>>, vector<8x23xf32>
    %c0_1 = arith.constant 0 : index
    %c0_2 = arith.constant 0 : index
    %1 = vector.load %arg2[%c0_1, %c0_2] : memref<23x63xf32, #tpu.memory_space<vmem>>, vector<23x63xf32>
    %cst = arith.constant dense<0.000000e+00> : vector<8x63xf32>
    %2 = tpu.matmul %0, %1, %cst {dimension_numbers = #tpu.dot_dimension_numbers<[1], [0], [0], [1], [0, 0, 1, 1], [], []>} : vector<8x23xf32>, vector<23x63xf32>, vector<8x63xf32> -> vector<8x63xf32>
    %c0_3 = arith.constant 0 : index
    %c0_4 = arith.constant 0 : index
    %3 = vector.load %arg3[%c0_3, %c0_4] : memref<1x63xf32, #tpu.memory_space<vmem>>, vector<1x63xf32>
    %4 = vector.broadcast %3 : vector<1x63xf32> to vector<8x63xf32>
    %5 = arith.addf %2, %4 : vector<8x63xf32>
    %c0_5 = arith.constant 0 : index
    %c0_6 = arith.constant 0 : index
    %6 = vector.load %arg4[%c0_5, %c0_6] : memref<8x63xf32, #tpu.memory_space<vmem>>, vector<8x63xf32>
    tpu.vector_store %arg4[%c0_5, %c0_6], %5 {strides = array<i32>} : memref<8x63xf32, #tpu.memory_space<vmem>>, vector<8x63xf32>,
    return
  }
  func.func @transform_0(%arg0: i32) -> (i32, i32) {
    %c0_i32 = arith.constant 0 : i32
    %c0_i32_0 = arith.constant 0 : i32
    return %arg0, %c0_i32 : i32, i32
  }
  func.func @transform_1(%arg0: i32) -> (i32, i32) {
    %c0_i32 = arith.constant 0 : i32
    %c0_i32_0 = arith.constant 0 : i32
    %c0_i32_1 = arith.constant 0 : i32
    return %c0_i32, %c0_i32_0 : i32, i32
  }
  func.func @transform_2(%arg0: i32) -> (i32, i32) {
    %c0_i32 = arith.constant 0 : i32
    %c0_i32_0 = arith.constant 0 : i32
    %c0_i32_1 = arith.constant 0 : i32
    return %c0_i32, %c0_i32_0 : i32, i32
  }
  func.func @transform_3(%arg0: i32) -> (i32, i32) {
    %c0_i32 = arith.constant 0 : i32
    %c0_i32_0 = arith.constant 0 : i32
    return %arg0, %c0_i32 : i32, i32
  }
}

</mosaic_0001>

<llo_original>
// kernel: vae_hand_decoder_fused.1
$region0: #{vae_hand_decoder_fused.1}
  #allocation0 [shape = 'u32[]', space=smem, size = 0x4, offset = 0x4, fixed_abs, tag = 'smem constant byte address 0x4 - core index']
  #allocation1 [shape = 'u32[72,128]{1,0:T(1,128)}', space=vmem, size = 0x9000, scoped, tag = 'internal scratch']
  %s0 = inlined_call_operand.hbm [shape: f32[8,23], index: 0, kind: input, shape index: {}]
  %s1 = inlined_call_operand.hbm [shape: f32[23,63], index: 1, kind: input, shape index: {}]
  %s2 = inlined_call_operand.vmem [shape: f32[1,63], index: 2, kind: input, shape index: {}]
  %s3 = inlined_call_operand.hbm [shape: f32[8,63], index: 3, kind: output, shape index: {}]
  %s4 = sld [smem:[#allocation0]]
  $region30: #{vae_hand_decoder_fused.1} parent=0
    _
  %s6 = ssub.s32 1, %s4
  %s7 = scalar_select 0, %s6, %s4
  $region1: #{vae_hand_decoder_fused.1} parent=0
    #allocation2 [shape = 'u8[4096]{0}', space=vmem, size = 0x1000, scoped, tag = 'input window, operand 0, single buffered']
    #allocation3 [shape = 's32[1]{0}', space=sflag, size = 0x4, scoped, tag = 'scoped memory for vae_hand_decoder_fused.1']
    #allocation4 [shape = 's32[1]{0}', space=sflag, size = 0x4, scoped, tag = 'scoped memory for vae_hand_decoder_fused.1']
    #allocation5 [shape = 'u8[12288]{0}', space=vmem, size = 0x3000, scoped, tag = 'input window, operand 1, single buffered']
    #allocation6 [shape = 's32[1]{0}', space=sflag, size = 0x4, scoped, tag = 'scoped memory for vae_hand_decoder_fused.1']
    #allocation7 [shape = 'u8[4096]{0}', space=vmem, size = 0x1000, scoped, tag = 'output window, operand 0, single buffered']
    %8 = vsyncpa [#allocation3], 0
    %9 = vsyncpa [#allocation6], 0
    %10 = vsyncpa [#allocation4], 0
    // Predicated region
    $region2: #{vae_hand_decoder_fused.1} parent=1 // pred_check
      _
    $region3: #{vae_hand_decoder_fused.1} parent=1 // pred_check_branch
      %12 = sbr.rel (0) target = $region5
    $region4: #{vae_hand_decoder_fused.1} parent=1 // pred_region
      %14 = vsyncadd [#allocation3], 0
      %s16 = sshll.u32 %s0, 4
      %s17 = int_to_ptr.hbm [resolvable:$true] %s16
      %s18 = sshll.u32 [#allocation2], 4
      %s19 = int_to_ptr.vmem [resolvable:$true] %s18
      %21 = dma.hbm_to_vmem [thread:$0]  %s17, 128, %s19, [#allocation3]
    $region5: #{vae_hand_decoder_fused.1} parent=1 // pred_fallthru
      _
    // Predicated region
    $region6: #{vae_hand_decoder_fused.1} parent=1 // pred_check
      _
    $region7: #{vae_hand_decoder_fused.1} parent=1 // pred_check_branch
      %23 = sbr.rel (0) target = $region9
    $region8: #{vae_hand_decoder_fused.1} parent=1 // pred_region
      %25 = vsyncadd [#allocation6], 0
      %s26 = sshll.u32 %s1, 4
      %s27 = int_to_ptr.hbm [resolvable:$true] %s26
      %s28 = sshll.u32 [#allocation5], 4
      %s29 = int_to_ptr.vmem [resolvable:$true] %s28
      %34 = dma.hbm_to_vmem [thread:$0]  %s27, 384, %s29, [#allocation6], 128, 128, 8
    $region9: #{vae_hand_decoder_fused.1} parent=1 // pred_fallthru
      _
    // Predicated region
    $region10: #{vae_hand_decoder_fused.1} parent=1 // pred_check
      _
    $region11: #{vae_hand_decoder_fused.1} parent=1 // pred_check_branch
      %36 = sbr.rel (0) target = $region13
    $region12: #{vae_hand_decoder_fused.1} parent=1 // pred_region
      _
    $region13: #{vae_hand_decoder_fused.1} parent=1 // pred_fallthru
      _
    // Predicated region
    $region14: #{vae_hand_decoder_fused.1} parent=1 // pred_check
      _
    $region15: #{vae_hand_decoder_fused.1} parent=1 // pred_check_branch
      %38 = sbr.rel (0) target = $region17
    $region16: #{vae_hand_decoder_fused.1} parent=1 // pred_region
      %40 = dma.done [#allocation3], 128
    $region17: #{vae_hand_decoder_fused.1} parent=1 // pred_fallthru
      _
    // Predicated region
    $region18: #{vae_hand_decoder_fused.1} parent=1 // pred_check
      _
    $region19: #{vae_hand_decoder_fused.1} parent=1 // pred_check_branch
      %42 = sbr.rel (0) target = $region21
    $region20: #{vae_hand_decoder_fused.1} parent=1 // pred_region
      %44 = dma.done [#allocation6], 384
    $region21: #{vae_hand_decoder_fused.1} parent=1 // pred_fallthru
      _
    %v45 = vld [vmem:[#allocation2] sm:$0xff]
    %v46 = vld [vmem:[#allocation5] sm:$0xff]
    %v47 = vld [vmem:[#allocation5 + $0x8] sm:$0xff]
    %v48 = vld [vmem:[#allocation5 + $0x10] sm:$0x7f]
    %v49 = vld [vmem:[%s2] sm:$0x1]
    %v51 = vperm.slane %v49, 0
    %vm53 = vcmask 187392
    %v55 = vsel %vm53, %v45, 0
    %vm57 = vcmask 1046528
    %v59 = vsel %vm57, %v48, 0
    %61 = vmatpush.msra.mxu0 0.0
    %62 = vmatpush.msra.mxu0 0.0
    %63 = vmatpush.msra.mxu0 0.0
    %64 = vmatpush.msra.mxu0 0.0
    %65 = vmatpush.msra.mxu0 0.0
    %66 = vmatpush.msra.mxu0 0.0
    %67 = vmatpush.msra.mxu0 0.0
    %68 = vmatpush.msra.mxu0 0.0
    %69 = vmatpush.msra.mxu0 0.0
    %70 = vmatpush.msra.mxu0 0.0
    %71 = vmatpush.msra.mxu0 0.0
    %72 = vmatpush.msra.mxu0 0.0
    %73 = vmatpush.msra.mxu0 0.0
    %74 = vmatpush.msra.mxu0 %v59
    %75 = vmatpush.msra.mxu0 %v47
    %76 = vmatpush.msra.mxu0 %v46
    %77 = vmatmul.f32.gmra.mxu0 %v55
    %v78 = vpop.f32.mrf.mxu0
    %v79 = vadd.f32 %v51, %v78
    %80 = vdwg.mxu0
    %vm81 = vcmask 515072
    %82 = vst.msk [vmem:[#allocation7] sm:$0xff] %vm81, %v79
    // Predicated region
    $region22: #{vae_hand_decoder_fused.1} parent=1 // pred_check
      _
    $region23: #{vae_hand_decoder_fused.1} parent=1 // pred_check_branch
      %84 = sbr.rel (0) target = $region25
    $region24: #{vae_hand_decoder_fused.1} parent=1 // pred_region
      %86 = vsyncadd [#allocation4], 0
      %s88 = sshll.u32 [#allocation7], 4
      %s89 = int_to_ptr.vmem [resolvable:$true] %s88
      %s90 = sshll.u32 %s3, 4
      %s91 = int_to_ptr.hbm [resolvable:$true] %s90
      %93 = dma.vmem_to_hbm [thread:$0]  %s89, 128, %s91, [#allocation4]
    $region25: #{vae_hand_decoder_fused.1} parent=1 // pred_fallthru
      _
    // Predicated region
    $region26: #{vae_hand_decoder_fused.1} parent=1 // pred_check
      _
    $region27: #{vae_hand_decoder_fused.1} parent=1 // pred_check_branch
      %95 = sbr.rel (0) target = $region29
    $region28: #{vae_hand_decoder_fused.1} parent=1 // pred_region
      %97 = dma.done [#allocation4], 128
    $region29: #{vae_hand_decoder_fused.1} parent=1 // pred_fallthru
      _
    %98 = vsyncpa [#allocation3], 1
    %99 = vsyncpa [#allocation6], 1
    %100 = vsyncpa [#allocation4], 1

</llo_original>
